<compile_context>
chip_gen: v7x
topology: tpu7x:2x2x1
jax: 0.10.0
libtpu: 0.0.40
codegen_flags: <defaults>
</compile_context>

<pallas_src>
import jax
import jax.numpy as jnp
from jax.experimental import pallas as pl
from jax.experimental.pallas import tpu as pltpu


def _transpose_kernel(x_ref, o_ref):
    # x_ref block: (TB, TS, TD)  ->  o_ref block: (TB, TD, TS)  (XLU transpose)
    o_ref[...] = jnp.transpose(x_ref[...], (0, 2, 1))


def _round_up(x, m):
    return ((x + m - 1) // m) * m


def _chip_params():
    """Generation-aware block-size / VMEM budgets (re-derived per chip)."""
    kind = ""
    try:
        kind = jax.devices()[0].device_kind.lower()
    except Exception:
        pass
    if "v7" in kind:
        # v7x: 64 MiB physical VMEM (32 MiB default scoped), 3.2 TB/s HBM,
        # 2 TensorCores -> need >= ~8 parallel grid steps; keep total pipeline
        # VMEM (in+out blocks x 2 buffers) around 16-24 MiB, limit <= 32 MiB.
        return dict(target_block_bytes=4 << 20, max_tile=1024,
                    vmem_cap_bytes=32 << 20, min_grid=8)
    if "v6" in kind or "v5p" in kind:
        # v6e / v5p: 128 MiB physical VMEM, ~1.4 TB/s HBM -> bigger blocks
        # (~8 MiB/buffer) cut the fixed ~0.35 us per-step overhead.
        return dict(target_block_bytes=8 << 20, max_tile=1024,
                    vmem_cap_bytes=64 << 20, min_grid=2)
    # v5e and unknown: 16 MiB default scoped VMEM, ~0.82 TB/s HBM -> keep the
    # conservative 2 MiB/buffer target (8 MiB pipeline footprint).
    return dict(target_block_bytes=2 << 20, max_tile=512,
                vmem_cap_bytes=16 << 20, min_grid=2)


def _pick_tiles(B, S, D, itemsize, params):
    """Pick (TB, TS, TD) given the chip's block budget and min grid size."""
    target = params["target_block_bytes"]
    max_tile = params["max_tile"]
    min_grid = params["min_grid"]

    # Keep a max_tile x max_tile tile within the per-buffer budget for wide
    # dtypes (max_tile stays a multiple of 128).
    while max_tile > 128 and max_tile * max_tile * itemsize > target:
        max_tile //= 2

    slab_bytes = S * D * itemsize
    if slab_bytes <= target:
        # Small (S, D) slab (ViT: 197x768 f32 ~ 600 KB): batch leading slices.
        # Last-two block dims equal the full array dims, so the (8, 128)
        # constraint is satisfied via the full-extent exemption (ragged S ok).
        TB = max(1, min(B, target // max(slab_bytes, 1)))
        TS, TD = S, D
        steps = pl.cdiv(B, TB)
        if steps < min_grid:
            # Shrink TB first (keeps full-extent blocks) so both v7x
            # TensorCores get work and the pipeline can double-buffer.
            TB = min(TB, max(1, B // min_grid))
            steps = pl.cdiv(B, TB)
        if steps < min_grid:
            # Still too few steps (tiny B): split D (preferred -- keeps the
            # output's last block dim == S) or S into 128-aligned tiles, 2-4x.
            splits = min(4, max(2, -(-min_grid // max(steps, 1))))
            if D >= 2 * 128:
                cand = max(128, _round_up(-(-D // splits), 128))
                if cand < D:
                    TD = cand
            elif S >= 2 * 128:
                cand = max(128, _round_up(-(-S // splits), 128))
                if cand < S:
                    TS = cand
        return TB, TS, TD

    # Large slab: 2-D tile S and D with 128-aligned tiles; ragged edge tiles
    # are handled by Pallas block padding (OOB reads padded, OOB writes
    # dropped).
    TS = S if S <= max_tile else max_tile
    TD = D if D <= max_tile else max_tile
    return 1, TS, TD


def transpose_pallas(x, dim0, dim1):
    """Pallas equivalent of torch.Tensor.transpose(dim0, dim1).

    The trailing-two-axes swap (the ViT `Transpose(1, 2)` usage on a 3-D
    [B, N, D] tensor) is implemented in-kernel; leading axes are collapsed
    into a batch dim.  Other axis swaps fall back to jnp.swapaxes.
    """
    rank = x.ndim
    d0 = dim0 % rank
    d1 = dim1 % rank
    if d0 == d1:
        return x
    lo, hi = sorted((d0, d1))
    if (lo, hi) != (rank - 2, rank - 1):
        # TODO(synk): a general non-trailing axis swap is not expressible as a
        # single on-chip tile transpose; only the trailing-two-axes case (the
        # ViT usage) is implemented in-kernel.  Fall back to XLA for others.
        return jnp.swapaxes(x, d0, d1)

    orig_shape = x.shape
    S, D = orig_shape[-2], orig_shape[-1]
    B = 1
    for s in orig_shape[:-2]:
        B *= s
    x3 = x.reshape(B, S, D)  # glue reshape only (leading dims collapsed)

    itemsize = jnp.dtype(x.dtype).itemsize
    params = _chip_params()
    TB, TS, TD = _pick_tiles(B, S, D, itemsize, params)
    grid = (pl.cdiv(B, TB), pl.cdiv(S, TS), pl.cdiv(D, TD))

    # Scoped-VMEM budget: in-block + out-block, double-buffered each, plus
    # headroom for Mosaic's internal scratch; capped per generation (v7x has
    # only 64 MiB physical VMEM).
    block_bytes = TB * TS * TD * itemsize
    vmem_limit = int(min(params["vmem_cap_bytes"],
                         max(4 * block_bytes + (8 << 20), 16 << 20)))

    out3 = pl.pallas_call(
        _transpose_kernel,
        out_shape=jax.ShapeDtypeStruct((B, D, S), x.dtype),
        grid_spec=pl.GridSpec(
            grid=grid,
            in_specs=[pl.BlockSpec((TB, TS, TD), lambda b, i, j: (b, i, j))],
            out_specs=pl.BlockSpec((TB, TD, TS), lambda b, i, j: (b, j, i)),
        ),
        compiler_params=pltpu.CompilerParams(
            # Every grid point writes a distinct output block -> fully
            # parallel; lets v7x shard the tile grid across its 2 TensorCores.
            dimension_semantics=("parallel", "parallel", "parallel"),
            vmem_limit_bytes=vmem_limit,
        ),
        cost_estimate=pl.CostEstimate(
            flops=0,
            transcendentals=0,
            bytes_accessed=2 * B * S * D * itemsize,
        ),
    )(x3)

    return out3.reshape(*orig_shape[:-2], D, S)


if __name__ == "__main__":
    key = jax.random.PRNGKey(0)
    k1, k2, k3, k4 = jax.random.split(key, 4)

    # 1) Small ViT-like token tensor (batch=2, seq=8, hidden=32): batched path.
    x1 = jax.random.normal(k1, (2, 8, 32), dtype=jnp.float32)
    y1 = jax.block_until_ready(transpose_pallas(x1, 1, 2))
    r1 = jnp.swapaxes(x1, 1, 2)
    assert y1.shape == r1.shape, (y1.shape, r1.shape)
    assert jnp.array_equal(y1, r1), "mismatch (batched path, f32)"

    # 2) bf16 with ragged seq length (ViT-style 197 tokens): batched path,
    #    full-extent blocks (exercises the dtype-packing / ragged-S path).
    x2 = jax.random.normal(k2, (2, 197, 64), dtype=jnp.bfloat16)
    y2 = jax.block_until_ready(transpose_pallas(x2, -2, -1))
    r2 = jnp.swapaxes(x2, -2, -1)
    assert y2.shape == r2.shape, (y2.shape, r2.shape)
    assert jnp.array_equal(y2, r2), "mismatch (batched path, bf16)"

    # 3) Slice just past the v5e per-block budget: exercises the 2-D tiled path
    #    on v5e and the D-split (128-aligned) path on v6e/v7x, with ragged
    #    edge tiles.
    x3 = jax.random.normal(k3, (1, 520, 1040), dtype=jnp.float32)
    y3 = jax.block_until_ready(transpose_pallas(x3, 1, 2))
    r3 = jnp.swapaxes(x3, 1, 2)
    assert y3.shape == r3.shape, (y3.shape, r3.shape)
    assert jnp.array_equal(y3, r3), "mismatch (tiled path, ragged edges)"

    # 4) 4-D input with multiple leading dims collapsed into the batch axis.
    x4 = jax.random.normal(k4, (2, 3, 16, 24), dtype=jnp.float32)
    y4 = jax.block_until_ready(transpose_pallas(x4, 2, 3))
    r4 = jnp.swapaxes(x4, 2, 3)
    assert y4.shape == r4.shape, (y4.shape, r4.shape)
    assert jnp.array_equal(y4, r4), "mismatch (4-D leading-dim collapse)"

    print("KERNEL_OK")
</pallas_src>

<mosaic_0001>
module attributes {stable_mosaic.version = 11 : i64} {
  func.func @_transpose_kernel(%arg0: i32, %arg1: i32, %arg2: i32, %arg3: memref<1x8x32xf32, #tpu.memory_space<vmem>>, %arg4: memref<1x32x8xf32, #tpu.memory_space<vmem>>) attributes {dimension_semantics = [#tpu.dimension_semantics<parallel>, #tpu.dimension_semantics<parallel>, #tpu.dimension_semantics<parallel>], iteration_bounds = array<i64: 2, 1, 1>, scalar_prefetch = 0 : i64, scratch_operands = 0 : i64, tpu.core_type = #tpu.core_type<tc>, window_params = [{transform_indices = @transform_0, window_bounds = array<i64: 1, 8, 32>}, {transform_indices = @transform_1, window_bounds = array<i64: 1, 32, 8>}]} {
    %c0 = arith.constant 0 : index
    %c0_0 = arith.constant 0 : index
    %c0_1 = arith.constant 0 : index
    %0 = vector.load %arg3[%c0, %c0_0, %c0_1] : memref<1x8x32xf32, #tpu.memory_space<vmem>>, vector<1x8x32xf32>
    %1 = tpu.transpose %0, [0, 2, 1] : vector<1x8x32xf32> -> vector<1x32x8xf32>
    %c0_2 = arith.constant 0 : index
    %c0_3 = arith.constant 0 : index
    %c0_4 = arith.constant 0 : index
    %2 = vector.load %arg4[%c0_2, %c0_3, %c0_4] : memref<1x32x8xf32, #tpu.memory_space<vmem>>, vector<1x32x8xf32>
    tpu.vector_store %arg4[%c0_2, %c0_3, %c0_4], %1 {strides = array<i32>} : memref<1x32x8xf32, #tpu.memory_space<vmem>>, vector<1x32x8xf32>,
    return
  }
  func.func @transform_0(%arg0: i32, %arg1: i32, %arg2: i32) -> (i32, i32, i32) {
    %c0_i32 = arith.constant 0 : i32
    return %arg0, %arg1, %arg2 : i32, i32, i32
  }
  func.func @transform_1(%arg0: i32, %arg1: i32, %arg2: i32) -> (i32, i32, i32) {
    %c0_i32 = arith.constant 0 : i32
    return %arg0, %arg2, %arg1 : i32, i32, i32
  }
}

</mosaic_0001>

<llo_original>
// kernel: tpu_custom_call.1
$region0: #{tpu_custom_call.1}
  #allocation0 [shape = 'u32[]', space=smem, size = 0x4, offset = 0x4, fixed_abs, tag = 'smem constant byte address 0x4 - core index']
  #allocation1 [shape = 'u32[144,128]{1,0:T(1,128)}', space=vmem, size = 0x12000, scoped, tag = 'internal scratch']
  %s0 = inlined_call_operand.hbm [shape: f32[2,8,32], index: 0, kind: input, shape index: {}]
  %s1 = inlined_call_operand.vmem [shape: f32[2,32,8], index: 1, kind: output, shape index: {}]
  %s2 = sld [smem:[#allocation0]]
  $region41: #{tpu_custom_call.1} parent=0
    _
  %s4 = ssub.s32 1, %s2
  %s5 = scalar_select 0, %s4, %s2
  $region1: #{tpu_custom_call.1} parent=0
    #allocation2 [shape = 'u8[8192]{0}', space=vmem, size = 0x2000, scoped, tag = 'input window, operand 0']
    #allocation3 [shape = 's32[2]{0}', space=sflag, size = 0x8, scoped, tag = 'scoped memory for tpu_custom_call.1']
    %6 = vsyncpa [#allocation3], 0
    %s7 = scalar_lea.sflag [#allocation3], 1
    %8 = vsyncpa %s7, 0
    loop: start=0, step=1, limit=4
    $region2: #{tpu_custom_call.1} parent=1 // loop_pre_header
      _
    $region3: #{tpu_custom_call.1} parent=1 // loop_header
      %s10 = sphi 0, %s14
      %p11 = scmp.ge.s32.totalorder %s10, 4
      %s17 = sphi 0, %s36
      %s18 = sphi 0, %s32
      %s19 = sphi 0, %s28
      %s20 = sphi 0, %s17
      %s21 = sphi 0, %s18
      %s22 = sphi 0, %s19
      %s23 = sphi 0, %s20
      %s24 = sphi 0, %s21
      %s25 = sphi 0, %s22
      %s43 = sphi 0, %s45
      %s46 = sphi 0, %s43
      %s47 = sphi 0, %s46
      %s63 = sphi 0, %s47
      %s73 = sphi 0, %s75
      %s76 = sphi 0, %s73
      %s77 = sphi 0, %s76
      %s93 = sphi 0, %s77
    $region4: #{tpu_custom_call.1} parent=1 // loop_header_branch
      %13 = sbr.rel (%p11) target = $region8
    $region5: #{tpu_custom_call.1} parent=1 // loop_body
      %s15 = ssub.s32 %s10, 1
      %s16 = ssub.s32 %s10, 2
      %s26 = sadd.s32 1, %s19
      %p27 = scmp.ge.s32.totalorder %s26, 1
      %s28 = scalar_select %p27, 0, %s26
      %s29 = sadd.s32 1, %s18
      %s30 = scalar_select %p27, %s29, %s18
      %p31 = scmp.ge.s32.totalorder %s30, 1
      %s32 = scalar_select %p31, 0, %s30
      %s33 = sadd.s32 1, %s17
      %s34 = scalar_select %p31, %s33, %s17
      %p35 = scmp.ge.s32.totalorder %s34, 2
      %s36 = scalar_select %p35, 0, %s34
      %s37 = ssub.s32 %s17, %s36
      %s38 = ssub.s32 %s18, %s32
      %s39 = sor.u32 %s37, %s38
      %s40 = ssub.s32 %s19, %s28
      %s41 = sor.u32 %s39, %s40
      %p42 = scmp.eq.s32.totalorder %s41, 0
      %s44 = sadd.s32 %s43, 1
      %s45 = scalar_select %p42, %s43, %s44
      %p48 = pneg %p42
      %p49 = scmp.eq.s32.totalorder %s10, 1
      %p50 = por %p48, %p49
      %p51 = scmp.ne.s32.totalorder %s43, %s46
      %p52 = scmp.eq.s32.totalorder %s10, 0
      %p53 = por %p51, %p52
      %p54 = scmp.ne.s32.totalorder %s43, %s46
      %p55 = scmp.eq.s32.totalorder %s15, 1
      %p56 = por %p54, %p55
      %p57 = scmp.ne.s32.totalorder %s46, %s47
      %p58 = scmp.eq.s32.totalorder %s15, 0
      %p59 = por %p57, %p58
      %p60 = scmp.ne.s32.totalorder %s46, %s47
      %p61 = scmp.eq.s32.totalorder %s16, 1
      %p62 = por %p60, %p61
      %p64 = scmp.ne.s32.totalorder %s47, %s63
      %p65 = scmp.eq.s32.totalorder %s16, 0
      %p66 = por %p64, %p65
      %s67 = ssub.s32 %s17, %s36
      %s68 = ssub.s32 %s19, %s28
      %s69 = sor.u32 %s67, %s68
      %s70 = ssub.s32 %s18, %s32
      %s71 = sor.u32 %s69, %s70
      %p72 = scmp.eq.s32.totalorder %s71, 0
      %s74 = sadd.s32 %s73, 1
      %s75 = scalar_select %p72, %s73, %s74
      %p78 = pneg %p72
      %p79 = scmp.eq.s32.totalorder %s10, 1
      %p80 = por %p78, %p79
      %p81 = scmp.ne.s32.totalorder %s73, %s76
      %p82 = scmp.eq.s32.totalorder %s10, 0
      %p83 = por %p81, %p82
      %p84 = scmp.ne.s32.totalorder %s73, %s76
      %p85 = scmp.eq.s32.totalorder %s15, 1
      %p86 = por %p84, %p85
      %p87 = scmp.ne.s32.totalorder %s76, %s77
      %p88 = scmp.eq.s32.totalorder %s15, 0
      %p89 = por %p87, %p88
      %p90 = scmp.ne.s32.totalorder %s76, %s77
      %p91 = scmp.eq.s32.totalorder %s16, 1
      %p92 = por %p90, %p91
      %p94 = scmp.ne.s32.totalorder %s77, %s93
      %p95 = scmp.eq.s32.totalorder %s16, 0
      %p96 = por %p94, %p95
      %p97 = scmp.le.s32.totalorder 1, %s10
      %p98 = scmp.lt.s32.totalorder %s10, 3
      %p99 = pnand %p97, %p98
      %p100 = pneg %p99
      // Predicated region
      $region9: #{tpu_custom_call.1} parent=5 // pred_check
        _
      $region10: #{tpu_custom_call.1} parent=5 // pred_check_branch
        %102 = sbr.rel (%p99) target = $region12
      $region11: #{tpu_custom_call.1} parent=5 // pred_region
        %s103 = ssub.s32 %s10, 1
      $region12: #{tpu_custom_call.1} parent=5 // pred_fallthru
        _
      %p104 = scmp.lt.s32.totalorder %s10, 2
      // Predicated region
      $region13: #{tpu_custom_call.1} parent=5 // pred_check
        %p105 = pneg %p104
      $region14: #{tpu_custom_call.1} parent=5 // pred_check_branch
        %107 = sbr.rel (%p105) target = $region16
      $region15: #{tpu_custom_call.1} parent=5 // pred_region
        // Predicated region
        $region17: #{tpu_custom_call.1} parent=15 // pred_check
          %p108 = pneg %p53
        $region18: #{tpu_custom_call.1} parent=15 // pred_check_branch
          %110 = sbr.rel (%p108) target = $region20
        $region19: #{tpu_custom_call.1} parent=15 // pred_region
          %s111 = sand.u32 %s43, 1
          %s112 = scalar_lea.sflag [#allocation3], %s111
          %s113 = sand.u32 %s43, 1
          %s114 = smul.addr %s113, 8
          %s115 = scalar_lea.vmem [#allocation2], %s114
          %s117 = ssub.s32 128, 128
          %118 = vsyncadd %s112, %s117
          %s119 = sadd.s32 %s19, %s18
          %s120 = sadd.s32 %s119, %s17
          %s121 = smul.addr %s120, 128
          %s122 = scalar_lea.hbm %s0, %s121
          %s124 = sshll.u32 %s115, 4
          %s125 = int_to_ptr.vmem [resolvable:$true] %s124
          %127 = dma.hbm_to_vmem [thread:$0]  %s122, 128, %s125, %s112
        $region20: #{tpu_custom_call.1} parent=15 // pred_fallthru
          _
      $region16: #{tpu_custom_call.1} parent=5 // pred_fallthru
        _
      %p128 = scmp.le.s32.totalorder 1, %s10
      %p129 = scmp.lt.s32.totalorder %s10, 3
      %p130 = pnand %p128, %p129
      %p131 = pneg %p130
      // Predicated region
      $region21: #{tpu_custom_call.1} parent=5 // pred_check
        _
      $region22: #{tpu_custom_call.1} parent=5 // pred_check_branch
        %133 = sbr.rel (%p130) target = $region24
      $region23: #{tpu_custom_call.1} parent=5 // pred_region
        %s134 = ssub.s32 %s10, 1
        %s135 = sand.u32 %s46, 1
        %s136 = scalar_lea.sflag [#allocation3], %s135
        %s137 = sand.u32 %s46, 1
        %s138 = smul.addr %s137, 8
        %s139 = scalar_lea.vmem [#allocation2], %s138
        // Predicated region
        $region25: #{tpu_custom_call.1} parent=23 // pred_check
          %p140 = pneg %p59
        $region26: #{tpu_custom_call.1} parent=23 // pred_check_branch
          %142 = sbr.rel (%p140) target = $region28
        $region27: #{tpu_custom_call.1} parent=23 // pred_region
          %143 = dma.done %s136, 128
        $region28: #{tpu_custom_call.1} parent=23 // pred_fallthru
          _
        %s144 = sand.u32 %s46, 1
        %s145 = scalar_lea.sflag [#allocation3], %s144
        %s146 = sand.u32 %s46, 1
        %s147 = smul.addr %s146, 8
        %s148 = scalar_lea.vmem [#allocation2], %s147
        %p149 = pneg %p59
        %p150 = pneg %p56
        %p151 = pneg %p89
        %p152 = pneg %p86
        %s153 = smul.u32 4, %s22
        %p154 = scmp.lt.s32.totalorder %s20, 1
        %s155 = scalar_select %p154, %s20, 1
        %p156 = scmp.lt.s32.totalorder %s153, 3
        %s157 = scalar_select %p156, %s153, 3
        %p158 = scmp.lt.s32.totalorder %s21, 0
        %s159 = scalar_select %p158, %s21, 0
        %s160 = sadd.s32 %s159, %s157
        %s161 = smul.addr %s155, 4
        %s162 = sadd.s32 %s160, %s161
        %s163 = smul.addr %s162, 8
        %s164 = scalar_lea.vmem %s1, %s163
        %s165 = smul.u32 4, %s22
        %p166 = scmp.lt.s32.totalorder %s20, 1
        %s167 = scalar_select %p166, %s20, 1
        %p168 = scmp.lt.s32.totalorder %s165, 3
        %s169 = scalar_select %p168, %s165, 3
        %p170 = scmp.lt.s32.totalorder %s21, 0
        %s171 = scalar_select %p170, %s21, 0
        %s172 = sadd.s32 %s171, %s169
        %s173 = smul.addr %s167, 4
        %s174 = sadd.s32 %s172, %s173
        %s175 = smul.addr %s174, 8
        %s176 = scalar_lea.vmem %s1, %s175
        %s177 = smul.u32 4, %s22
        %v178 = vld [vmem:[%s139] sm:$0xff]
        %179 = vxpose.xlu0.b32.start [1/16] %v178, 128
        %180 = vxpose.xlu0.b32.cont [2/16] 0.0, 128
        %181 = vxpose.xlu0.b32.cont [3/16] 0.0, 128
        %182 = vxpose.xlu0.b32.cont [4/16] 0.0, 128
        %183 = vxpose.xlu0.b32.cont [5/16] 0.0, 128
        %184 = vxpose.xlu0.b32.cont [6/16] 0.0, 128
        %185 = vxpose.xlu0.b32.cont [7/16] 0.0, 128
        %186 = vxpose.xlu0.b32.cont [8/16] 0.0, 128
        %187 = vxpose.xlu0.b32.cont [9/16] 0.0, 128
        %188 = vxpose.xlu0.b32.cont [10/16] 0.0, 128
        %189 = vxpose.xlu0.b32.cont [11/16] 0.0, 128
        %190 = vxpose.xlu0.b32.cont [12/16] 0.0, 128
        %191 = vxpose.xlu0.b32.cont [13/16] 0.0, 128
        %192 = vxpose.xlu0.b32.cont [14/16] 0.0, 128
        %193 = vxpose.xlu0.b32.cont [15/16] 0.0, 128
        %194 = vxpose.xlu0.b32.end [16/16] 0.0, 128
        %v195 = vpop.trf.xlu0
        %v196 = vpop.trf.xlu0
        %v197 = vpop.trf.xlu0
        %v198 = vpop.trf.xlu0
        %v199 = vpop.trf.xlu0
        %v200 = vpop.trf.xlu0
        %v201 = vpop.trf.xlu0
        %v202 = vpop.trf.xlu0
        %v203 = vpop.trf.xlu0
        %v204 = vpop.trf.xlu0
        %v205 = vpop.trf.xlu0
        %v206 = vpop.trf.xlu0
        %v207 = vpop.trf.xlu0
        %v208 = vpop.trf.xlu0
        %v209 = vpop.trf.xlu0
        %v210 = vpop.trf.xlu0
        %vm211 = vcmask 64512
        %212 = vst.msk [vmem:[%s176] sm:$0xff] %vm211, %v195
        %213 = vst.msk [vmem:[%s176 + $0x8] sm:$0xff] %vm211, %v196
        %214 = vst.msk [vmem:[%s176 + $0x10] sm:$0xff] %vm211, %v197
        %215 = vst.msk [vmem:[%s176 + $0x18] sm:$0xff] %vm211, %v198
        %s216 = smul.u32 4, %s22
        %p217 = scmp.lt.s32.totalorder %s20, 1
        %s218 = scalar_select %p217, %s20, 1
        %p219 = scmp.lt.s32.totalorder %s216, 3
        %s220 = scalar_select %p219, %s216, 3
        %p221 = scmp.lt.s32.totalorder %s21, 0
        %s222 = scalar_select %p221, %s21, 0
        %s223 = sadd.s32 %s222, %s220
        %s224 = smul.addr %s218, 4
        %s225 = sadd.s32 %s223, %s224
        %s226 = smul.addr %s225, 8
        %s227 = scalar_lea.vmem %s1, %s226
        // Predicated region
        $region29: #{tpu_custom_call.1} parent=23 // pred_check
          %p228 = pneg %p86
        $region30: #{tpu_custom_call.1} parent=23 // pred_check_branch
          %230 = sbr.rel (%p228) target = $region32
        $region31: #{tpu_custom_call.1} parent=23 // pred_region
          %s231 = smul.u32 4, %s22
        $region32: #{tpu_custom_call.1} parent=23 // pred_fallthru
          _
      $region24: #{tpu_custom_call.1} parent=5 // pred_fallthru
        _
      %p232 = scmp.le.s32.totalorder 2, %s10
      // Predicated region
      $region33: #{tpu_custom_call.1} parent=5 // pred_check
        %p233 = pneg %p232
      $region34: #{tpu_custom_call.1} parent=5 // pred_check_branch
        %235 = sbr.rel (%p233) target = $region36
      $region35: #{tpu_custom_call.1} parent=5 // pred_region
        %s236 = ssub.s32 %s10, 2
        // Predicated region
        $region37: #{tpu_custom_call.1} parent=35 // pred_check
          %p237 = pneg %p92
        $region38: #{tpu_custom_call.1} parent=35 // pred_check_branch
          %239 = sbr.rel (%p237) target = $region40
        $region39: #{tpu_custom_call.1} parent=35 // pred_region
          %s240 = smul.u32 4, %s25
          %p241 = scmp.lt.s32.totalorder %s23, 1
          %s242 = scalar_select %p241, %s23, 1
          %p243 = scmp.lt.s32.totalorder %s240, 3
          %s244 = scalar_select %p243, %s240, 3
          %p245 = scmp.lt.s32.totalorder %s24, 0
          %s246 = scalar_select %p245, %s24, 0
          %s247 = sadd.s32 %s246, %s244
          %s248 = smul.addr %s242, 4
          %s249 = sadd.s32 %s247, %s248
          %s250 = smul.addr %s249, 8
          %s251 = scalar_lea.vmem %s1, %s250
        $region40: #{tpu_custom_call.1} parent=35 // pred_fallthru
          _
      $region36: #{tpu_custom_call.1} parent=5 // pred_fallthru
        _
    $region6: #{tpu_custom_call.1} parent=1 // loop_footer
      %s14 = sadd.s32 1, %s10
    $region7: #{tpu_custom_call.1} parent=1 // loop_footer_branch
      %9 = sbr.rel target = $region3
    $region8: #{tpu_custom_call.1} parent=1 // loop_exit
      _
    %252 = vsyncpa [#allocation3], 1
    %s253 = scalar_lea.sflag [#allocation3], 1
    %254 = vsyncpa %s253, 1

</llo_original>
